<compile_context>
chip_gen: v7x
topology: tpu7x:2x2x1
jax: 0.10.0
libtpu: 0.0.40
codegen_flags: <defaults>
</compile_context>

<pallas_src>
import functools

import jax
import jax.numpy as jnp
from jax.experimental import pallas as pl
from jax.experimental.pallas import tpu as pltpu


def _cdiv(a, b):
    return -(-a // b)


def _round_up(x, m):
    return _cdiv(x, m) * m


def soft_q_kernel(xT_ref, w1_ref, b1_ref, w2_ref, b2_ref, w3_ref, b3_ref, o_ref):
    # Layer 1 (concat fused by wrapper; contraction zero-padded to K=8):
    # f32 MXU matmul keeps full fp32 fidelity on raw observations.
    h1 = jnp.dot(w1_ref[...], xT_ref[...], preferred_element_type=jnp.float32)
    h1 = jnp.maximum(h1 + b1_ref[...], 0.0)            # (H, TB); bias lane-broadcast

    # Layer 2: bf16 MXU operands, f32 accumulation; bias-add + ReLU in f32.
    h2 = jnp.dot(w2_ref[...], h1.astype(jnp.bfloat16),
                 preferred_element_type=jnp.float32)
    h2 = jnp.maximum(h2 + b2_ref[...], 0.0)            # (H, TB)

    # Layer 3: W3 zero-padded to 8 output rows -> plain (8,H)@(H,TB) MXU
    # matmul.  Row 0 is q; rows 1..7 are discarded by the wrapper.  Keeps the
    # 1-wide head off the VPU and the store lane-dense / unmasked.
    q8 = jnp.dot(w3_ref[...], h2, preferred_element_type=jnp.float32)
    o_ref[...] = (q8 + b3_ref[...]).astype(o_ref.dtype)


def _choose_tiles(batch, tb_max):
    """Balanced, lane-aligned batch tiling (feedback items 4 & 5)."""
    bp = _round_up(batch, 128)                 # batch is the lane dim -> 128-align
    n_tiles = _cdiv(bp, tb_max)
    if bp >= 256:                              # give v7x's two TCs >=1 tile each
        n_tiles = max(n_tiles, 2)
    tb = _round_up(_cdiv(bp, n_tiles), 128)    # equal tiles, bounded padding
    bp = _round_up(bp, tb)
    return bp, tb


@functools.partial(jax.jit, static_argnames=("tb",))
def soft_q_forward(state, action, params, tb=512):
    """state: [B, num_inputs], action: [B, num_actions] -> q: [B, 1]."""
    w1, b1, w2, b2, w3, b3 = params
    B = state.shape[0]
    H, kp = w1.shape                           # kp = round_up(num_inputs+num_actions, 8)

    # Fused torch.cat([state, action], 1) + zero-pad of the contraction dim.
    x = jnp.concatenate(
        [state.astype(jnp.float32), action.astype(jnp.float32)], axis=1)

    bp, tb_eff = _choose_tiles(B, tb)
    x = jnp.pad(x, ((0, bp - B), (0, kp - x.shape[1])))
    xT = x.T                                    # (kp, bp): batch on lanes

    grid = (bp // tb_eff,)

    # Weights/biases: full-array blocks at a constant index -> VMEM-resident.
    const = lambda p: pl.BlockSpec(p.shape, lambda i: (0,) * p.ndim)

    param_bytes = sum(int(p.size) * p.dtype.itemsize for p in params)
    cost = pl.CostEstimate(
        flops=2 * bp * (kp * H + H * H + 8 * H),
        transcendentals=0,
        bytes_accessed=param_bytes + bp * (kp + 8) * 4,
    )

    out = pl.pallas_call(
        soft_q_kernel,
        out_shape=jax.ShapeDtypeStruct((8, bp), jnp.float32),
        grid=grid,
        in_specs=[
            pl.BlockSpec((kp, tb_eff), lambda i: (0, i)),   # x^T tile (lane-dense)
            const(w1), const(b1), const(w2), const(b2), const(w3), const(b3),
        ],
        out_specs=pl.BlockSpec((8, tb_eff), lambda i: (0, i)),  # lane-dense q rows
        compiler_params=pltpu.CompilerParams(
            dimension_semantics=("parallel",)),
        cost_estimate=cost,
    )(xT, w1, b1, w2, b2, w3, b3)

    return out[0, :B].reshape(B, 1)


def init_params(key, num_inputs, num_actions, hidden_size=256, init_w=0.003):
    """Mirrors nn.Linear default init + uniform(-init_w, init_w) on linear3.

    Weights are kept in PyTorch (out_features, in_features) layout because the
    kernel computes h^T = W @ x^T.  W1 has its input dim zero-padded to a
    multiple of 8 (fused concat), W3 its output dim zero-padded to 8 rows."""
    in_dim = num_inputs + num_actions
    kp = _round_up(in_dim, 8)
    k = jax.random.split(key, 6)

    def uniform(k_, shape, bound):
        return jax.random.uniform(k_, shape, jnp.float32, -bound, bound)

    b1_bound = 1.0 / float(in_dim) ** 0.5
    b2_bound = 1.0 / float(hidden_size) ** 0.5

    w1 = uniform(k[0], (hidden_size, in_dim), b1_bound)
    w1 = jnp.pad(w1, ((0, 0), (0, kp - in_dim)))              # (H, kp) f32
    b1 = uniform(k[1], (hidden_size, 1), b1_bound)            # (H, 1)  f32

    w2 = uniform(k[2], (hidden_size, hidden_size), b2_bound).astype(jnp.bfloat16)
    b2 = uniform(k[3], (hidden_size, 1), b2_bound)            # (H, 1)  f32

    w3 = uniform(k[4], (1, hidden_size), init_w)
    w3 = jnp.pad(w3, ((0, 7), (0, 0)))                        # (8, H)  f32
    b3 = uniform(k[5], (1, 1), init_w)                        # (1, 1)  f32

    return (w1, b1, w2, b2, w3, b3)


if __name__ == "__main__":
    # Pendulum-v0: observation dim = 3, action dim = 1.
    B, NUM_INPUTS, NUM_ACTIONS, HIDDEN = 2, 3, 1, 256

    key = jax.random.PRNGKey(0)
    k_state, k_action, k_params = jax.random.split(key, 3)

    state = jax.random.normal(k_state, (B, NUM_INPUTS), jnp.float32)
    action = jax.random.normal(k_action, (B, NUM_ACTIONS), jnp.float32)
    params = init_params(k_params, NUM_INPUTS, NUM_ACTIONS, HIDDEN)

    q = soft_q_forward(state, action, params)
    q = jax.block_until_ready(q)

    # Pure-JAX reference mirroring the kernel numerics (f32 layer 1,
    # bf16-operand / f32-accumulate layer 2, f32 head).
    w1, b1, w2, b2, w3, b3 = params
    x = jnp.concatenate([state, action], axis=1)
    xp = jnp.pad(x, ((0, 0), (0, w1.shape[1] - x.shape[1])))
    h1 = jnp.maximum(jnp.dot(xp, w1.T) + b1[:, 0], 0.0)
    h2 = jnp.maximum(
        jnp.dot(h1.astype(jnp.bfloat16), w2.T,
                preferred_element_type=jnp.float32) + b2[:, 0], 0.0)
    ref = (jnp.dot(h2, w3[0]) + b3[0, 0]).reshape(B, 1)

    assert q.shape == (B, 1)
    assert jnp.allclose(q, ref, atol=1e-2, rtol=1e-2), (q, ref)

    print("KERNEL_OK")
</pallas_src>

<mosaic_0001>
module attributes {stable_mosaic.version = 11 : i64} {
  func.func @soft_q_kernel(%arg0: i32, %arg1: memref<8x128xf32, #tpu.memory_space<vmem>>, %arg2: memref<256x8xf32, #tpu.memory_space<vmem>>, %arg3: memref<256x1xf32, #tpu.memory_space<vmem>>, %arg4: memref<256x256xbf16, #tpu.memory_space<vmem>>, %arg5: memref<256x1xf32, #tpu.memory_space<vmem>>, %arg6: memref<8x256xf32, #tpu.memory_space<vmem>>, %arg7: memref<1x1xf32, #tpu.memory_space<vmem>>, %arg8: memref<8x128xf32, #tpu.memory_space<vmem>>) attributes {dimension_semantics = [#tpu.dimension_semantics<parallel>], iteration_bounds = array<i64: 1>, scalar_prefetch = 0 : i64, scratch_operands = 0 : i64, tpu.core_type = #tpu.core_type<tc>, window_params = [{transform_indices = @transform_0, window_bounds = array<i64: 8, 128>}, {pipeline_mode = #tpu.pipeline_mode<synchronous>, transform_indices = @transform_1, window_bounds = array<i64: 256, 8>}, {pipeline_mode = #tpu.pipeline_mode<synchronous>, transform_indices = @transform_2, window_bounds = array<i64: 256, 1>}, {pipeline_mode = #tpu.pipeline_mode<synchronous>, transform_indices = @transform_3, window_bounds = array<i64: 256, 256>}, {pipeline_mode = #tpu.pipeline_mode<synchronous>, transform_indices = @transform_4, window_bounds = array<i64: 256, 1>}, {pipeline_mode = #tpu.pipeline_mode<synchronous>, transform_indices = @transform_5, window_bounds = array<i64: 8, 256>}, {pipeline_mode = #tpu.pipeline_mode<synchronous>, transform_indices = @transform_6, window_bounds = array<i64: 1, 1>}, {transform_indices = @transform_7, window_bounds = array<i64: 8, 128>}]} {
    %c0 = arith.constant 0 : index
    %c0_0 = arith.constant 0 : index
    %0 = vector.load %arg2[%c0, %c0_0] : memref<256x8xf32, #tpu.memory_space<vmem>>, vector<256x8xf32>
    %c0_1 = arith.constant 0 : index
    %c0_2 = arith.constant 0 : index
    %1 = vector.load %arg1[%c0_1, %c0_2] : memref<8x128xf32, #tpu.memory_space<vmem>>, vector<8x128xf32>
    %cst = arith.constant dense<0.000000e+00> : vector<256x128xf32>
    %2 = tpu.matmul %0, %1, %cst {dimension_numbers = #tpu.dot_dimension_numbers<[1], [0], [0], [1], [0, 0, 1, 1], [], []>} : vector<256x8xf32>, vector<8x128xf32>, vector<256x128xf32> -> vector<256x128xf32>
    %c0_3 = arith.constant 0 : index
    %c0_4 = arith.constant 0 : index
    %3 = vector.load %arg3[%c0_3, %c0_4] : memref<256x1xf32, #tpu.memory_space<vmem>>, vector<256x1xf32>
    %4 = vector.broadcast %3 : vector<256x1xf32> to vector<256x128xf32>
    %5 = arith.addf %2, %4 : vector<256x128xf32>
    %cst_5 = arith.constant 0.000000e+00 : f32
    %6 = vector.broadcast %cst_5 : f32 to vector<256x128xf32>
    %7 = arith.maximumf %5, %6 : vector<256x128xf32>
    %c0_6 = arith.constant 0 : index
    %c0_7 = arith.constant 0 : index
    %8 = vector.load %arg4[%c0_6, %c0_7] : memref<256x256xbf16, #tpu.memory_space<vmem>>, vector<256x256xbf16>
    %9 = arith.truncf %7 : vector<256x128xf32> to vector<256x128xbf16>
    %cst_8 = arith.constant dense<0.000000e+00> : vector<256x128xf32>
    %10 = tpu.matmul %8, %9, %cst_8 {dimension_numbers = #tpu.dot_dimension_numbers<[1], [0], [0], [1], [0, 0, 1, 1], [], []>} : vector<256x256xbf16>, vector<256x128xbf16>, vector<256x128xf32> -> vector<256x128xf32>
    %c0_9 = arith.constant 0 : index
    %c0_10 = arith.constant 0 : index
    %11 = vector.load %arg5[%c0_9, %c0_10] : memref<256x1xf32, #tpu.memory_space<vmem>>, vector<256x1xf32>
    %12 = vector.broadcast %11 : vector<256x1xf32> to vector<256x128xf32>
    %13 = arith.addf %10, %12 : vector<256x128xf32>
    %cst_11 = arith.constant 0.000000e+00 : f32
    %14 = vector.broadcast %cst_11 : f32 to vector<256x128xf32>
    %15 = arith.maximumf %13, %14 : vector<256x128xf32>
    %c0_12 = arith.constant 0 : index
    %c0_13 = arith.constant 0 : index
    %16 = vector.load %arg6[%c0_12, %c0_13] : memref<8x256xf32, #tpu.memory_space<vmem>>, vector<8x256xf32>
    %cst_14 = arith.constant dense<0.000000e+00> : vector<8x128xf32>
    %17 = tpu.matmul %16, %15, %cst_14 {dimension_numbers = #tpu.dot_dimension_numbers<[1], [0], [0], [1], [0, 0, 1, 1], [], []>} : vector<8x256xf32>, vector<256x128xf32>, vector<8x128xf32> -> vector<8x128xf32>
    %c0_15 = arith.constant 0 : index
    %c0_16 = arith.constant 0 : index
    %18 = vector.load %arg7[%c0_15, %c0_16] : memref<1x1xf32, #tpu.memory_space<vmem>>, vector<1x1xf32>
    %19 = vector.broadcast %18 : vector<1x1xf32> to vector<8x128xf32>
    %20 = arith.addf %17, %19 : vector<8x128xf32>
    %c0_17 = arith.constant 0 : index
    %c0_18 = arith.constant 0 : index
    %21 = vector.load %arg8[%c0_17, %c0_18] : memref<8x128xf32, #tpu.memory_space<vmem>>, vector<8x128xf32>
    tpu.vector_store %arg8[%c0_17, %c0_18], %20 {strides = array<i32>} : memref<8x128xf32, #tpu.memory_space<vmem>>, vector<8x128xf32>,
    return
  }
  func.func @transform_0(%arg0: i32) -> (i32, i32) {
    %c0_i32 = arith.constant 0 : i32
    %c0_i32_0 = arith.constant 0 : i32
    return %c0_i32, %arg0 : i32, i32
  }
  func.func @transform_1(%arg0: i32) -> (i32, i32) {
    %c0_i32 = arith.constant 0 : i32
    %c0_i32_0 = arith.constant 0 : i32
    %c0_i32_1 = arith.constant 0 : i32
    return %c0_i32, %c0_i32_0 : i32, i32
  }
  func.func @transform_2(%arg0: i32) -> (i32, i32) {
    %c0_i32 = arith.constant 0 : i32
    %c0_i32_0 = arith.constant 0 : i32
    %c0_i32_1 = arith.constant 0 : i32
    return %c0_i32, %c0_i32_0 : i32, i32
  }
  func.func @transform_3(%arg0: i32) -> (i32, i32) {
    %c0_i32 = arith.constant 0 : i32
    %c0_i32_0 = arith.constant 0 : i32
    %c0_i32_1 = arith.constant 0 : i32
    return %c0_i32, %c0_i32_0 : i32, i32
  }
  func.func @transform_4(%arg0: i32) -> (i32, i32) {
    %c0_i32 = arith.constant 0 : i32
    %c0_i32_0 = arith.constant 0 : i32
    %c0_i32_1 = arith.constant 0 : i32
    return %c0_i32, %c0_i32_0 : i32, i32
  }
  func.func @transform_5(%arg0: i32) -> (i32, i32) {
    %c0_i32 = arith.constant 0 : i32
    %c0_i32_0 = arith.constant 0 : i32
    %c0_i32_1 = arith.constant 0 : i32
    return %c0_i32, %c0_i32_0 : i32, i32
  }
  func.func @transform_6(%arg0: i32) -> (i32, i32) {
    %c0_i32 = arith.constant 0 : i32
    %c0_i32_0 = arith.constant 0 : i32
    %c0_i32_1 = arith.constant 0 : i32
    return %c0_i32, %c0_i32_0 : i32, i32
  }
  func.func @transform_7(%arg0: i32) -> (i32, i32) {
    %c0_i32 = arith.constant 0 : i32
    %c0_i32_0 = arith.constant 0 : i32
    return %c0_i32, %arg0 : i32, i32
  }
}

</mosaic_0001>

<llo_original>
// kernel: soft_q_forward.1
$region0: #{soft_q_forward.1}
  #allocation0 [shape = 'u32[]', space=smem, size = 0x4, offset = 0x4, fixed_abs, tag = 'smem constant byte address 0x4 - core index']
  #allocation1 [shape = 'u32[144,128]{1,0:T(1,128)}', space=vmem, size = 0x12000, scoped, tag = 'internal scratch']
  #allocation2 [shape = 'f32[1,1]{1,0:T(1,128)S(1)}', space=vmem, size = 0x200, scoped, tag = 'scoped memory for soft_q_forward.1']
  %s0 = inlined_call_operand.vmem [shape: f32[8,128], index: 0, kind: input, shape index: {}]
  %s1 = inlined_call_operand.vmem [shape: f32[256,8], index: 1, kind: input, shape index: {}]
  %s2 = inlined_call_operand.vmem [shape: f32[256,1], index: 2, kind: input, shape index: {}]
  %s3 = inlined_call_operand.vmem [shape: bf16[256,256], index: 3, kind: input, shape index: {}]
  %s4 = inlined_call_operand.vmem [shape: f32[256,1], index: 4, kind: input, shape index: {}]
  %s5 = inlined_call_operand.vmem [shape: f32[8,256], index: 5, kind: input, shape index: {}]
  %s6 = inlined_call_operand.<no memory space> [shape: f32[1,1], index: 6, kind: input, shape index: {}]
  %s7 = inlined_call_operand.vmem [shape: f32[8,128], index: 7, kind: output, shape index: {}]
  %s8 = sld [smem:[#allocation0]]
  $region38: #{soft_q_forward.1} parent=0
    _
  %s10 = ssub.s32 1, %s8
  %s11 = scalar_select 0, %s10, %s8
  %v12 = vstv %s6
  %13 = vst [vmem:[#allocation2] sm:$0x1] %v12
  // Predicated region
  $region2: #{soft_q_forward.1} parent=0 // pred_check
    _
  $region3: #{soft_q_forward.1} parent=0 // pred_check_branch
    %15 = sbr.rel (0) target = $region5
  $region4: #{soft_q_forward.1} parent=0 // pred_region
    _
  $region5: #{soft_q_forward.1} parent=0 // pred_fallthru
    _
  // Predicated region
  $region6: #{soft_q_forward.1} parent=0 // pred_check
    _
  $region7: #{soft_q_forward.1} parent=0 // pred_check_branch
    %17 = sbr.rel (0) target = $region9
  $region8: #{soft_q_forward.1} parent=0 // pred_region
    _
  $region9: #{soft_q_forward.1} parent=0 // pred_fallthru
    _
  // Predicated region
  $region10: #{soft_q_forward.1} parent=0 // pred_check
    _
  $region11: #{soft_q_forward.1} parent=0 // pred_check_branch
    %19 = sbr.rel (0) target = $region13
  $region12: #{soft_q_forward.1} parent=0 // pred_region
    _
  $region13: #{soft_q_forward.1} parent=0 // pred_fallthru
    _
  // Predicated region
  $region14: #{soft_q_forward.1} parent=0 // pred_check
    _
  $region15: #{soft_q_forward.1} parent=0 // pred_check_branch
    %21 = sbr.rel (0) target = $region17
  $region16: #{soft_q_forward.1} parent=0 // pred_region
    _
  $region17: #{soft_q_forward.1} parent=0 // pred_fallthru
    _
  // Predicated region
  $region18: #{soft_q_forward.1} parent=0 // pred_check
    _
  $region19: #{soft_q_forward.1} parent=0 // pred_check_branch
    %23 = sbr.rel (0) target = $region21
  $region20: #{soft_q_forward.1} parent=0 // pred_region
    _
  $region21: #{soft_q_forward.1} parent=0 // pred_fallthru
    _
  // Predicated region
  $region22: #{soft_q_forward.1} parent=0 // pred_check
    _
  $region23: #{soft_q_forward.1} parent=0 // pred_check_branch
    %25 = sbr.rel (0) target = $region25
  $region24: #{soft_q_forward.1} parent=0 // pred_region
    _
  $region25: #{soft_q_forward.1} parent=0 // pred_fallthru
    _
  // Predicated region
  $region26: #{soft_q_forward.1} parent=0 // pred_check
    _
  $region27: #{soft_q_forward.1} parent=0 // pred_check_branch
    %27 = sbr.rel (0) target = $region29
  $region28: #{soft_q_forward.1} parent=0 // pred_region
    _
  $region29: #{soft_q_forward.1} parent=0 // pred_fallthru
    _
  %v29 = vld [vmem:[%s1] sm:$0xff]
  %v30 = vld [vmem:[%s1 + $0x8] sm:$0xff]
  %v31 = vld [vmem:[%s1 + $0x10] sm:$0xff]
  %v32 = vld [vmem:[%s1 + $0x18] sm:$0xff]
  %v33 = vld [vmem:[%s1 + $0x20] sm:$0xff]
  %v34 = vld [vmem:[%s1 + $0x28] sm:$0xff]
  %v35 = vld [vmem:[%s1 + $0x30] sm:$0xff]
  %v36 = vld [vmem:[%s1 + $0x38] sm:$0xff]
  %v37 = vld [vmem:[%s1 + $0x40] sm:$0xff]
  %v38 = vld [vmem:[%s1 + $0x48] sm:$0xff]
  %v39 = vld [vmem:[%s1 + $0x50] sm:$0xff]
  %v40 = vld [vmem:[%s1 + $0x58] sm:$0xff]
  %v41 = vld [vmem:[%s1 + $0x60] sm:$0xff]
  %v42 = vld [vmem:[%s1 + $0x68] sm:$0xff]
  %v43 = vld [vmem:[%s1 + $0x70] sm:$0xff]
  %v44 = vld [vmem:[%s1 + $0x78] sm:$0xff]
  %v45 = vld [vmem:[%s1 + $0x80] sm:$0xff]
  %v46 = vld [vmem:[%s1 + $0x88] sm:$0xff]
  %v47 = vld [vmem:[%s1 + $0x90] sm:$0xff]
  %v48 = vld [vmem:[%s1 + $0x98] sm:$0xff]
  %v49 = vld [vmem:[%s1 + $0xa0] sm:$0xff]
  %v50 = vld [vmem:[%s1 + $0xa8] sm:$0xff]
  %v51 = vld [vmem:[%s1 + $0xb0] sm:$0xff]
  %v52 = vld [vmem:[%s1 + $0xb8] sm:$0xff]
  %v53 = vld [vmem:[%s1 + $0xc0] sm:$0xff]
  %v54 = vld [vmem:[%s1 + $0xc8] sm:$0xff]
  %v55 = vld [vmem:[%s1 + $0xd0] sm:$0xff]
  %v56 = vld [vmem:[%s1 + $0xd8] sm:$0xff]
  %v57 = vld [vmem:[%s1 + $0xe0] sm:$0xff]
  %v58 = vld [vmem:[%s1 + $0xe8] sm:$0xff]
  %v59 = vld [vmem:[%s1 + $0xf0] sm:$0xff]
  %v60 = vld [vmem:[%s1 + $0xf8] sm:$0xff]
  %v61 = vld [vmem:[%s0] sm:$0xff]
  %v62 = vld [vmem:[%s2] sm:$0xff]
  %v63 = vld [vmem:[%s2 + $0x8] sm:$0xff]
  %v64 = vld [vmem:[%s2 + $0x10] sm:$0xff]
  %v65 = vld [vmem:[%s2 + $0x18] sm:$0xff]
  %v66 = vld [vmem:[%s2 + $0x20] sm:$0xff]
  %v67 = vld [vmem:[%s2 + $0x28] sm:$0xff]
  %v68 = vld [vmem:[%s2 + $0x30] sm:$0xff]
  %v69 = vld [vmem:[%s2 + $0x38] sm:$0xff]
  %v70 = vld [vmem:[%s2 + $0x40] sm:$0xff]
  %v71 = vld [vmem:[%s2 + $0x48] sm:$0xff]
  %v72 = vld [vmem:[%s2 + $0x50] sm:$0xff]
  %v73 = vld [vmem:[%s2 + $0x58] sm:$0xff]
  %v74 = vld [vmem:[%s2 + $0x60] sm:$0xff]
  %v75 = vld [vmem:[%s2 + $0x68] sm:$0xff]
  %v76 = vld [vmem:[%s2 + $0x70] sm:$0xff]
  %v77 = vld [vmem:[%s2 + $0x78] sm:$0xff]
  %v78 = vld [vmem:[%s2 + $0x80] sm:$0xff]
  %v79 = vld [vmem:[%s2 + $0x88] sm:$0xff]
  %v80 = vld [vmem:[%s2 + $0x90] sm:$0xff]
  %v81 = vld [vmem:[%s2 + $0x98] sm:$0xff]
  %v82 = vld [vmem:[%s2 + $0xa0] sm:$0xff]
  %v83 = vld [vmem:[%s2 + $0xa8] sm:$0xff]
  %v84 = vld [vmem:[%s2 + $0xb0] sm:$0xff]
  %v85 = vld [vmem:[%s2 + $0xb8] sm:$0xff]
  %v86 = vld [vmem:[%s2 + $0xc0] sm:$0xff]
  %v87 = vld [vmem:[%s2 + $0xc8] sm:$0xff]
  %v88 = vld [vmem:[%s2 + $0xd0] sm:$0xff]
  %v89 = vld [vmem:[%s2 + $0xd8] sm:$0xff]
  %v90 = vld [vmem:[%s2 + $0xe0] sm:$0xff]
  %v91 = vld [vmem:[%s2 + $0xe8] sm:$0xff]
  %v92 = vld [vmem:[%s2 + $0xf0] sm:$0xff]
  %v93 = vld [vmem:[%s2 + $0xf8] sm:$0xff]
  %95 = vset.pattern.permute.xlu0 0
  %96 = vperm.xlu0 %95, %v62
  %v97 = vpop.permute.xlu0 %96
  %100 = vset.pattern.permute.xlu0 0
  %101 = vperm.xlu0 %100, %v63
  %v102 = vpop.permute.xlu0 %101
  %105 = vset.pattern.permute.xlu0 0
  %106 = vperm.xlu0 %105, %v64
  %v107 = vpop.permute.xlu0 %106
  %110 = vset.pattern.permute.xlu0 0
  %111 = vperm.xlu0 %110, %v65
  %v112 = vpop.permute.xlu0 %111
  %115 = vset.pattern.permute.xlu0 0
  %116 = vperm.xlu0 %115, %v66
  %v117 = vpop.permute.xlu0 %116
  %120 = vset.pattern.permute.xlu0 0
  %121 = vperm.xlu0 %120, %v67
  %v122 = vpop.permute.xlu0 %121
  %125 = vset.pattern.permute.xlu0 0
  %126 = vperm.xlu0 %125, %v68
  %v127 = vpop.permute.xlu0 %126
  %130 = vset.pattern.permute.xlu0 0
  %131 = vperm.xlu0 %130, %v69
  %v132 = vpop.permute.xlu0 %131
  %135 = vset.pattern.permute.xlu0 0
  %136 = vperm.xlu0 %135, %v70
  %v137 = vpop.permute.xlu0 %136
  %140 = vset.pattern.permute.xlu0 0
  %141 = vperm.xlu0 %140, %v71
  %v142 = vpop.permute.xlu0 %141
  %145 = vset.pattern.permute.xlu0 0
  %146 = vperm.xlu0 %145, %v72
  %v147 = vpop.permute.xlu0 %146
  %150 = vset.pattern.permute.xlu0 0
  %151 = vperm.xlu0 %150, %v73
  %v152 = vpop.permute.xlu0 %151
  %155 = vset.pattern.permute.xlu0 0
  %156 = vperm.xlu0 %155, %v74
  %v157 = vpop.permute.xlu0 %156
  %160 = vset.pattern.permute.xlu0 0
  %161 = vperm.xlu0 %160, %v75
  %v162 = vpop.permute.xlu0 %161
  %165 = vset.pattern.permute.xlu0 0
  %166 = vperm.xlu0 %165, %v76
  %v167 = vpop.permute.xlu0 %166
  %170 = vset.pattern.permute.xlu0 0
  %171 = vperm.xlu0 %170, %v77
  %v172 = vpop.permute.xlu0 %171
  %175 = vset.pattern.permute.xlu0 0
  %176 = vperm.xlu0 %175, %v78
  %v177 = vpop.permute.xlu0 %176
  %180 = vset.pattern.permute.xlu0 0
  %181 = vperm.xlu0 %180, %v79
  %v182 = vpop.permute.xlu0 %181
  %185 = vset.pattern.permute.xlu0 0
  %186 = vperm.xlu0 %185, %v80
  %v187 = vpop.permute.xlu0 %186
  %190 = vset.pattern.permute.xlu0 0
  %191 = vperm.xlu0 %190, %v81
  %v192 = vpop.permute.xlu0 %191
  %195 = vset.pattern.permute.xlu0 0
  %196 = vperm.xlu0 %195, %v82
  %v197 = vpop.permute.xlu0 %196
  %200 = vset.pattern.permute.xlu0 0
  %201 = vperm.xlu0 %200, %v83
  %v202 = vpop.permute.xlu0 %201
  %205 = vset.pattern.permute.xlu0 0
  %206 = vperm.xlu0 %205, %v84
  %v207 = vpop.permute.xlu0 %206
  %210 = vset.pattern.permute.xlu0 0
  %211 = vperm.xlu0 %210, %v85
  %v212 = vpop.permute.xlu0 %211
  %215 = vset.pattern.permute.xlu0 0
  %216 = vperm.xlu0 %215, %v86
  %v217 = vpop.permute.xlu0 %216
  %220 = vset.pattern.permute.xlu0 0
  %221 = vperm.xlu0 %220, %v87
  %v222 = vpop.permute.xlu0 %221
  %225 = vset.pattern.permute.xlu0 0
  %226 = vperm.xlu0 %225, %v88
  %v227 = vpop.permute.xlu0 %226
  %230 = vset.pattern.permute.xlu0 0
  %231 = vperm.xlu0 %230, %v89
  %v232 = vpop.permute.xlu0 %231
  %235 = vset.pattern.permute.xlu0 0
  %236 = vperm.xlu0 %235, %v90
  %v237 = vpop.permute.xlu0 %236
  %240 = vset.pattern.permute.xlu0 0
  %241 = vperm.xlu0 %240, %v91
  %v242 = vpop.permute.xlu0 %241
  %245 = vset.pattern.permute.xlu0 0
  %246 = vperm.xlu0 %245, %v92
  %v247 = vpop.permute.xlu0 %246
  %250 = vset.pattern.permute.xlu0 0
  %251 = vperm.xlu0 %250, %v93
  %v252 = vpop.permute.xlu0 %251
  %vm254 = vcmask 64512
  %v256 = vsel %vm254, %v29, 0
  %v259 = vsel %vm254, %v30, 0
  %v262 = vsel %vm254, %v31, 0
  %v265 = vsel %vm254, %v32, 0
  %v268 = vsel %vm254, %v33, 0
  %v271 = vsel %vm254, %v34, 0
  %v274 = vsel %vm254, %v35, 0
  %v277 = vsel %vm254, %v36, 0
  %v280 = vsel %vm254, %v37, 0
  %v283 = vsel %vm254, %v38, 0
  %v286 = vsel %vm254, %v39, 0
  %v289 = vsel %vm254, %v40, 0
  %v292 = vsel %vm254, %v41, 0
  %v295 = vsel %vm254, %v42, 0
  %v298 = vsel %vm254, %v43, 0
  %v301 = vsel %vm254, %v44, 0
  %v304 = vsel %vm254, %v45, 0
  %v307 = vsel %vm254, %v46, 0
  %v310 = vsel %vm254, %v47, 0
  %v313 = vsel %vm254, %v48, 0
  %v316 = vsel %vm254, %v49, 0
  %v319 = vsel %vm254, %v50, 0
  %v322 = vsel %vm254, %v51, 0
  %v325 = vsel %vm254, %v52, 0
  %v328 = vsel %vm254, %v53, 0
  %v331 = vsel %vm254, %v54, 0
  %v334 = vsel %vm254, %v55, 0
  %v337 = vsel %vm254, %v56, 0
  %v340 = vsel %vm254, %v57, 0
  %v343 = vsel %vm254, %v58, 0
  %v346 = vsel %vm254, %v59, 0
  %v349 = vsel %vm254, %v60, 0
  %351 = vmatprep.subr.mxu0 0.0
  %352 = vmatpush1.msra.mxu0 %v61
  %353 = vmatprep.subr.mxu0 0.0
  %354 = vmatpush1.msra.mxu0 0.0
  %355 = vmatprep.subr.mxu0 0.0
  %356 = vmatpush1.msra.mxu0 0.0
  %357 = vmatprep.subr.mxu0 0.0
  %358 = vmatpush1.msra.mxu0 0.0
  %359 = vmatprep.subr.mxu0 0.0
  %360 = vmatpush1.msra.mxu0 0.0
  %361 = vmatprep.subr.mxu0 0.0
  %362 = vmatpush1.msra.mxu0 0.0
  %363 = vmatprep.subr.mxu0 0.0
  %364 = vmatpush1.msra.mxu0 0.0
  %365 = vmatprep.subr.mxu0 0.0
  %366 = vmatpush1.msra.mxu0 0.0
  %367 = vmatprep.subr.mxu0 0.0
  %368 = vmatpush1.msra.mxu0 0.0
  %369 = vmatprep.subr.mxu0 0.0
  %370 = vmatpush1.msra.mxu0 0.0
  %371 = vmatprep.subr.mxu0 0.0
  %372 = vmatpush1.msra.mxu0 0.0
  %373 = vmatprep.subr.mxu0 0.0
  %374 = vmatpush1.msra.mxu0 0.0
  %375 = vmatprep.subr.mxu0 0.0
  %376 = vmatpush1.msra.mxu0 0.0
  %377 = vmatprep.subr.mxu0 0.0
  %378 = vmatpush1.msra.mxu0 0.0
  %379 = vmatprep.subr.mxu0 0.0
  %380 = vmatpush1.msra.mxu0 0.0
  %381 = vmatprep.subr.mxu0 0.0
  %382 = vmatpush1.msra.mxu0 0.0
  %383 = vmatprep.subr.mxu0 0.0
  %384 = vmatpush1.msra.mxu0 0.0
  %385 = vmatprep.subr.mxu0 0.0
  %386 = vmatpush1.msra.mxu0 0.0
  %387 = vmatprep.subr.mxu0 0.0
  %388 = vmatpush1.msra.mxu0 0.0
  %389 = vmatprep.subr.mxu0 0.0
  %390 = vmatpush1.msra.mxu0 0.0
  %391 = vmatprep.subr.mxu0 0.0
  %392 = vmatpush1.msra.mxu0 0.0
  %393 = vmatprep.subr.mxu0 0.0
  %394 = vmatpush1.msra.mxu0 0.0
  %395 = vmatprep.subr.mxu0 0.0
  %396 = vmatpush1.msra.mxu0 0.0
  %397 = vmatprep.subr.mxu0 0.0
  %398 = vmatpush1.msra.mxu0 0.0
  %399 = vmatprep.subr.mxu0 0.0
  %400 = vmatpush1.msra.mxu0 0.0
  %401 = vmatprep.subr.mxu0 0.0
  %402 = vmatpush1.msra.mxu0 0.0
  %403 = vmatprep.subr.mxu0 0.0
  %404 = vmatpush1.msra.mxu0 0.0
  %405 = vmatprep.subr.mxu0 0.0
  %406 = vmatpush1.msra.mxu0 0.0
  %407 = vmatprep.subr.mxu0 0.0
  %408 = vmatpush1.msra.mxu0 0.0
  %409 = vmatprep.subr.mxu0 0.0
  %410 = vmatpush1.msra.mxu0 0.0
  %411 = vmatprep.subr.mxu0 0.0
  %412 = vmatpush1.msra.mxu0 0.0
  %413 = vmatprep.subr.mxu0 0.0
  %414 = vmatpush1.msra.mxu0 0.0
  %415 = vmatprep.mubr.f32.mxu0 0.0
  %416 = vmatmul.mubr.f32.gmra.mrb[0].mxu0 %v256
  %v417 = vpop.f32.mrb[0].mxu0
  %v418 = vadd.f32 %v97, %v417
  %v419 = vpop.f32.mrb[0].mxu0
  %420 = vmatprep.mubr.f32.mxu0 0.0
  %421 = vmatmul.mubr.f32.gmra.mrb[0].mxu0 %v259
  %v422 = vpop.f32.mrb[0].mxu0
  %v423 = vadd.f32 %v102, %v422
  %v424 = vpop.f32.mrb[0].mxu0
  %425 = vmatprep.mubr.f32.mxu0 0.0
  %426 = vmatmul.mubr.f32.gmra.mrb[0].mxu0 %v262
  %v427 = vpop.f32.mrb[0].mxu0
  %v428 = vadd.f32 %v107, %v427
  %v429 = vpop.f32.mrb[0].mxu0
  %430 = vmatprep.mubr.f32.mxu0 0.0
  %431 = vmatmul.mubr.f32.gmra.mrb[0].mxu0 %v265
  %v432 = vpop.f32.mrb[0].mxu0
  %v433 = vadd.f32 %v112, %v432
  %v434 = vpop.f32.mrb[0].mxu0
  %435 = vmatprep.mubr.f32.mxu0 0.0
  %436 = vmatmul.mubr.f32.gmra.mrb[0].mxu0 %v268
  %v437 = vpop.f32.mrb[0].mxu0
  %v438 = vadd.f32 %v117, %v437
  %v439 = vpop.f32.mrb[0].mxu0
  %440 = vmatprep.mubr.f32.mxu0 0.0
  %441 = vmatmul.mubr.f32.gmra.mrb[0].mxu0 %v271
  %v442 = vpop.f32.mrb[0].mxu0
  %v443 = vadd.f32 %v122, %v442
  %v444 = vpop.f32.mrb[0].mxu0
  %445 = vmatprep.mubr.f32.mxu0 0.0
  %446 = vmatmul.mubr.f32.gmra.mrb[0].mxu0 %v274
  %v447 = vpop.f32.mrb[0].mxu0
  %v448 = vadd.f32 %v127, %v447
  %v449 = vpop.f32.mrb[0].mxu0
  %450 = vmatprep.mubr.f32.mxu0 0.0
  %451 = vmatmul.mubr.f32.gmra.mrb[0].mxu0 %v277
  %v452 = vpop.f32.mrb[0].mxu0
  %v453 = vadd.f32 %v132, %v452
  %v454 = vpop.f32.mrb[0].mxu0
  %455 = vmatprep.mubr.f32.mxu0 0.0
  %456 = vmatmul.mubr.f32.gmra.mrb[0].mxu0 %v280
  %v457 = vpop.f32.mrb[0].mxu0
  %v458 = vadd.f32 %v137, %v457
  %v459 = vpop.f32.mrb[0].mxu0
  %460 = vmatprep.mubr.f32.mxu0 0.0
  %461 = vmatmul.mubr.f32.gmra.mrb[0].mxu0 %v283
  %v462 = vpop.f32.mrb[0].mxu0
  %v463 = vadd.f32 %v142, %v462
  %v464 = vpop.f32.mrb[0].mxu0
  %465 = vmatprep.mubr.f32.mxu0 0.0
  %466 = vmatmul.mubr.f32.gmra.mrb[0].mxu0 %v286
  %v467 = vpop.f32.mrb[0].mxu0
  %v468 = vadd.f32 %v147, %v467
  %v469 = vpop.f32.mrb[0].mxu0
  %470 = vmatprep.mubr.f32.mxu0 0.0
  %471 = vmatmul.mubr.f32.gmra.mrb[0].mxu0 %v289
  %v472 = vpop.f32.mrb[0].mxu0
  %v473 = vadd.f32 %v152, %v472
  %v474 = vpop.f32.mrb[0].mxu0
  %475 = vmatprep.mubr.f32.mxu0 0.0
  %476 = vmatmul.mubr.f32.gmra.mrb[0].mxu0 %v292
  %v477 = vpop.f32.mrb[0].mxu0
  %v478 = vadd.f32 %v157, %v477
  %v479 = vpop.f32.mrb[0].mxu0
  %480 = vmatprep.mubr.f32.mxu0 0.0
  %481 = vmatmul.mubr.f32.gmra.mrb[0].mxu0 %v295
  %v482 = vpop.f32.mrb[0].mxu0
  %v483 = vadd.f32 %v162, %v482
  %v484 = vpop.f32.mrb[0].mxu0
  %485 = vmatprep.mubr.f32.mxu0 0.0
  %486 = vmatmul.mubr.f32.gmra.mrb[0].mxu0 %v298
  %v487 = vpop.f32.mrb[0].mxu0
  %v488 = vadd.f32 %v167, %v487
  %v489 = vpop.f32.mrb[0].mxu0
  %490 = vmatprep.mubr.f32.mxu0 0.0
  %491 = vmatmul.mubr.f32.gmra.mrb[0].mxu0 %v301
  %v492 = vpop.f32.mrb[0].mxu0
  %v493 = vadd.f32 %v172, %v492
  %v494 = vpop.f32.mrb[0].mxu0
  %495 = vmatprep.mubr.f32.mxu0 0.0
  %496 = vmatmul.mubr.f32.gmra.mrb[0].mxu0 %v304
  %v497 = vpop.f32.mrb[0].mxu0
  %v498 = vadd.f32 %v177, %v497
  %v499 = vpop.f32.mrb[0].mxu0
  %500 = vmatprep.mubr.f32.mxu0 0.0
  %501 = vmatmul.mubr.f32.gmra.mrb[0].mxu0 %v307
  %v502 = vpop.f32.mrb[0].mxu0
  %v503 = vadd.f32 %v182, %v502
  %v504 = vpop.f32.mrb[0].mxu0
  %505 = vmatprep.mubr.f32.mxu0 0.0
  %506 = vmatmul.mubr.f32.gmra.mrb[0].mxu0 %v310
  %v507 = vpop.f32.mrb[0].mxu0
  %v508 = vadd.f32 %v187, %v507
  %v509 = vpop.f32.mrb[0].mxu0
  %510 = vmatprep.mubr.f32.mxu0 0.0
  %511 = vmatmul.mubr.f32.gmra.mrb[0].mxu0 %v313
  %v512 = vpop.f32.mrb[0].mxu0
  %v513 = vadd.f32 %v192, %v512
  %v514 = vpop.f32.mrb[0].mxu0
  %515 = vmatprep.mubr.f32.mxu0 0.0
  %516 = vmatmul.mubr.f32.gmra.mrb[0].mxu0 %v316
  %v517 = vpop.f32.mrb[0].mxu0
  %v518 = vadd.f32 %v197, %v517
  %v519 = vpop.f32.mrb[0].mxu0
  %520 = vmatprep.mubr.f32.mxu0 0.0
  %521 = vmatmul.mubr.f32.gmra.mrb[0].mxu0 %v319
  %v522 = vpop.f32.mrb[0].mxu0
  %v523 = vadd.f32 %v202, %v522
  %v524 = vpop.f32.mrb[0].mxu0
  %525 = vmatprep.mubr.f32.mxu0 0.0
  %526 = vmatmul.mubr.f32.gmra.mrb[0].mxu0 %v322
  %v527 = vpop.f32.mrb[0].mxu0
  %v528 = vadd.f32 %v207, %v527
  %v529 = vpop.f32.mrb[0].mxu0
  %530 = vmatprep.mubr.f32.mxu0 0.0
  %531 = vmatmul.mubr.f32.gmra.mrb[0].mxu0 %v325
  %v532 = vpop.f32.mrb[0].mxu0
  %v533 = vadd.f32 %v212, %v532
  %v534 = vpop.f32.mrb[0].mxu0
  %535 = vmatprep.mubr.f32.mxu0 0.0
  %536 = vmatmul.mubr.f32.gmra.mrb[0].mxu0 %v328
  %v537 = vpop.f32.mrb[0].mxu0
  %v538 = vadd.f32 %v217, %v537
  %v539 = vpop.f32.mrb[0].mxu0
  %540 = vmatprep.mubr.f32.mxu0 0.0
  %541 = vmatmul.mubr.f32.gmra.mrb[0].mxu0 %v331
  %v542 = vpop.f32.mrb[0].mxu0
  %v543 = vadd.f32 %v222, %v542
  %v544 = vpop.f32.mrb[0].mxu0
  %545 = vmatprep.mubr.f32.mxu0 0.0
  %546 = vmatmul.mubr.f32.gmra.mrb[0].mxu0 %v334
  %v547 = vpop.f32.mrb[0].mxu0
  %v548 = vadd.f32 %v227, %v547
  %v549 = vpop.f32.mrb[0].mxu0
  %550 = vmatprep.mubr.f32.mxu0 0.0
  %551 = vmatmul.mubr.f32.gmra.mrb[0].mxu0 %v337
  %v552 = vpop.f32.mrb[0].mxu0
  %v553 = vadd.f32 %v232, %v552
  %v554 = vpop.f32.mrb[0].mxu0
  %555 = vmatprep.mubr.f32.mxu0 0.0
  %556 = vmatmul.mubr.f32.gmra.mrb[0].mxu0 %v340
  %v557 = vpop.f32.mrb[0].mxu0
  %v558 = vadd.f32 %v237, %v557
  %v559 = vpop.f32.mrb[0].mxu0
  %560 = vmatprep.mubr.f32.mxu0 0.0
  %561 = vmatmul.mubr.f32.gmra.mrb[0].mxu0 %v343
  %v562 = vpop.f32.mrb[0].mxu0
  %v563 = vadd.f32 %v242, %v562
  %v564 = vpop.f32.mrb[0].mxu0
  %565 = vmatprep.mubr.f32.mxu0 0.0
  %566 = vmatmul.mubr.f32.gmra.mrb[0].mxu0 %v346
  %v567 = vpop.f32.mrb[0].mxu0
  %v568 = vadd.f32 %v247, %v567
  %v569 = vpop.f32.mrb[0].mxu0
  %570 = vmatprep.mubr.f32.mxu0 0.0
  %571 = vmatmul.mubr.f32.gmra.mrb[0].mxu0 %v349
  %v572 = vpop.f32.mrb[0].mxu0
  %v573 = vadd.f32 %v252, %v572
  %v574 = vpop.f32.mrb[0].mxu0
  %575 = vdwg.mxu0
  %v576 = vmax.f32 %v418, 0.0
  %v577 = vmax.f32 %v423, 0.0
  %v578 = vmax.f32 %v428, 0.0
  %v579 = vmax.f32 %v433, 0.0
  %v580 = vmax.f32 %v438, 0.0
  %v581 = vmax.f32 %v443, 0.0
  %v582 = vmax.f32 %v448, 0.0
  %v583 = vmax.f32 %v453, 0.0
  %v584 = vmax.f32 %v458, 0.0
  %v585 = vmax.f32 %v463, 0.0
  %v586 = vmax.f32 %v468, 0.0
  %v587 = vmax.f32 %v473, 0.0
  %v588 = vmax.f32 %v478, 0.0
  %v589 = vmax.f32 %v483, 0.0
  %v590 = vmax.f32 %v488, 0.0
  %v591 = vmax.f32 %v493, 0.0
  %v592 = vmax.f32 %v498, 0.0
  %v593 = vmax.f32 %v503, 0.0
  %v594 = vmax.f32 %v508, 0.0
  %v595 = vmax.f32 %v513, 0.0
  %v596 = vmax.f32 %v518, 0.0
  %v597 = vmax.f32 %v523, 0.0
  %v598 = vmax.f32 %v528, 0.0
  %v599 = vmax.f32 %v533, 0.0
  %v600 = vmax.f32 %v538, 0.0
  %v601 = vmax.f32 %v543, 0.0
  %v602 = vmax.f32 %v548, 0.0
  %v603 = vmax.f32 %v553, 0.0
  %v604 = vmax.f32 %v558, 0.0
  %v605 = vmax.f32 %v563, 0.0
  %v606 = vmax.f32 %v568, 0.0
  %v607 = vmax.f32 %v573, 0.0
  %v608 = vld [vmem:[%s3] sm:$0xff]
  %v609 = vld [vmem:[%s3 + $0x8] sm:$0xff]
  %v610 = vld [vmem:[%s3 + $0x10] sm:$0xff]
  %v611 = vld [vmem:[%s3 + $0x18] sm:$0xff]
  %v612 = vld [vmem:[%s3 + $0x20] sm:$0xff]
  %v613 = vld [vmem:[%s3 + $0x28] sm:$0xff]
  %v614 = vld [vmem:[%s3 + $0x30] sm:$0xff]
  %v615 = vld [vmem:[%s3 + $0x38] sm:$0xff]
  %v616 = vld [vmem:[%s3 + $0x40] sm:$0xff]
  %v617 = vld [vmem:[%s3 + $0x48] sm:$0xff]
  %v618 = vld [vmem:[%s3 + $0x50] sm:$0xff]
  %v619 = vld [vmem:[%s3 + $0x58] sm:$0xff]
  %v620 = vld [vmem:[%s3 + $0x60] sm:$0xff]
  %v621 = vld [vmem:[%s3 + $0x68] sm:$0xff]
  %v622 = vld [vmem:[%s3 + $0x70] sm:$0xff]
  %v623 = vld [vmem:[%s3 + $0x78] sm:$0xff]
  %v624 = vld [vmem:[%s3 + $0x80] sm:$0xff]
  %v625 = vld [vmem:[%s3 + $0x88] sm:$0xff]
  %v626 = vld [vmem:[%s3 + $0x90] sm:$0xff]
  %v627 = vld [vmem:[%s3 + $0x98] sm:$0xff]
  %v628 = vld [vmem:[%s3 + $0xa0] sm:$0xff]
  %v629 = vld [vmem:[%s3 + $0xa8] sm:$0xff]
  %v630 = vld [vmem:[%s3 + $0xb0] sm:$0xff]
  %v631 = vld [vmem:[%s3 + $0xb8] sm:$0xff]
  %v632 = vld [vmem:[%s3 + $0xc0] sm:$0xff]
  %v633 = vld [vmem:[%s3 + $0xc8] sm:$0xff]
  %v634 = vld [vmem:[%s3 + $0xd0] sm:$0xff]
  %v635 = vld [vmem:[%s3 + $0xd8] sm:$0xff]
  %v636 = vld [vmem:[%s3 + $0xe0] sm:$0xff]
  %v637 = vld [vmem:[%s3 + $0xe8] sm:$0xff]
  %v638 = vld [vmem:[%s3 + $0xf0] sm:$0xff]
  %v639 = vld [vmem:[%s3 + $0xf8] sm:$0xff]
  %v640 = vpack.c.bf16 %v577, %v576
  %v641 = vpack.c.bf16 %v579, %v578
  %v642 = vpack.c.bf16 %v581, %v580
  %v643 = vpack.c.bf16 %v583, %v582
  %v644 = vpack.c.bf16 %v585, %v584
  %v645 = vpack.c.bf16 %v587, %v586
  %v646 = vpack.c.bf16 %v589, %v588
  %v647 = vpack.c.bf16 %v591, %v590
  %v648 = vpack.c.bf16 %v593, %v592
  %v649 = vpack.c.bf16 %v595, %v594
  %v650 = vpack.c.bf16 %v597, %v596
  %v651 = vpack.c.bf16 %v599, %v598
  %v652 = vpack.c.bf16 %v601, %v600
  %v653 = vpack.c.bf16 %v603, %v602
  %v654 = vpack.c.bf16 %v605, %v604
  %v655 = vpack.c.bf16 %v607, %v606
  %v656 = vld [vmem:[%s4] sm:$0xff]
  %v657 = vld [vmem:[%s4 + $0x8] sm:$0xff]
  %v658 = vld [vmem:[%s4 + $0x10] sm:$0xff]
  %v659 = vld [vmem:[%s4 + $0x18] sm:$0xff]
  %v660 = vld [vmem:[%s4 + $0x20] sm:$0xff]
  %v661 = vld [vmem:[%s4 + $0x28] sm:$0xff]
  %v662 = vld [vmem:[%s4 + $0x30] sm:$0xff]
  %v663 = vld [vmem:[%s4 + $0x38] sm:$0xff]
  %v664 = vld [vmem:[%s4 + $0x40] sm:$0xff]
  %v665 = vld [vmem:[%s4 + $0x48] sm:$0xff]
  %v666 = vld [vmem:[%s4 + $0x50] sm:$0xff]
  %v667 = vld [vmem:[%s4 + $0x58] sm:$0xff]
  %v668 = vld [vmem:[%s4 + $0x60] sm:$0xff]
  %v669 = vld [vmem:[%s4 + $0x68] sm:$0xff]
  %v670 = vld [vmem:[%s4 + $0x70] sm:$0xff]
  %v671 = vld [vmem:[%s4 + $0x78] sm:$0xff]
  %v672 = vld [vmem:[%s4 + $0x80] sm:$0xff]
  %v673 = vld [vmem:[%s4 + $0x88] sm:$0xff]
  %v674 = vld [vmem:[%s4 + $0x90] sm:$0xff]
  %v675 = vld [vmem:[%s4 + $0x98] sm:$0xff]
  %v676 = vld [vmem:[%s4 + $0xa0] sm:$0xff]
  %v677 = vld [vmem:[%s4 + $0xa8] sm:$0xff]
  %v678 = vld [vmem:[%s4 + $0xb0] sm:$0xff]
  %v679 = vld [vmem:[%s4 + $0xb8] sm:$0xff]
  %v680 = vld [vmem:[%s4 + $0xc0] sm:$0xff]
  %v681 = vld [vmem:[%s4 + $0xc8] sm:$0xff]
  %v682 = vld [vmem:[%s4 + $0xd0] sm:$0xff]
  %v683 = vld [vmem:[%s4 + $0xd8] sm:$0xff]
  %v684 = vld [vmem:[%s4 + $0xe0] sm:$0xff]
  %v685 = vld [vmem:[%s4 + $0xe8] sm:$0xff]
  %v686 = vld [vmem:[%s4 + $0xf0] sm:$0xff]
  %v687 = vld [vmem:[%s4 + $0xf8] sm:$0xff]
  %689 = vset.pattern.permute.xlu0 0
  %690 = vperm.xlu0 %689, %v656
  %v691 = vpop.permute.xlu0 %690
  %694 = vset.pattern.permute.xlu0 0
  %695 = vperm.xlu0 %694, %v657
  %v696 = vpop.permute.xlu0 %695
  %699 = vset.pattern.permute.xlu0 0
  %700 = vperm.xlu0 %699, %v658
  %v701 = vpop.permute.xlu0 %700
  %704 = vset.pattern.permute.xlu0 0
  %705 = vperm.xlu0 %704, %v659
  %v706 = vpop.permute.xlu0 %705
  %709 = vset.pattern.permute.xlu0 0
  %710 = vperm.xlu0 %709, %v660
  %v711 = vpop.permute.xlu0 %710
  %714 = vset.pattern.permute.xlu0 0
  %715 = vperm.xlu0 %714, %v661
  %v716 = vpop.permute.xlu0 %715
  %719 = vset.pattern.permute.xlu0 0
  %720 = vperm.xlu0 %719, %v662
  %v721 = vpop.permute.xlu0 %720
  %724 = vset.pattern.permute.xlu0 0
  %725 = vperm.xlu0 %724, %v663
  %v726 = vpop.permute.xlu0 %725
  %729 = vset.pattern.permute.xlu0 0
  %730 = vperm.xlu0 %729, %v664
  %v731 = vpop.permute.xlu0 %730
  %734 = vset.pattern.permute.xlu0 0
  %735 = vperm.xlu0 %734, %v665
  %v736 = vpop.permute.xlu0 %735
  %739 = vset.pattern.permute.xlu0 0
  %740 = vperm.xlu0 %739, %v666
  %v741 = vpop.permute.xlu0 %740
  %744 = vset.pattern.permute.xlu0 0
  %745 = vperm.xlu0 %744, %v667
  %v746 = vpop.permute.xlu0 %745
  %749 = vset.pattern.permute.xlu0 0
  %750 = vperm.xlu0 %749, %v668
  %v751 = vpop.permute.xlu0 %750
  %754 = vset.pattern.permute.xlu0 0
  %755 = vperm.xlu0 %754, %v669
  %v756 = vpop.permute.xlu0 %755
  %759 = vset.pattern.permute.xlu0 0
  %760 = vperm.xlu0 %759, %v670
  %v761 = vpop.permute.xlu0 %760
  %764 = vset.pattern.permute.xlu0 0
  %765 = vperm.xlu0 %764, %v671
  %v766 = vpop.permute.xlu0 %765
  %769 = vset.pattern.permute.xlu0 0
  %770 = vperm.xlu0 %769, %v672
  %v771 = vpop.permute.xlu0 %770
  %774 = vset.pattern.permute.xlu0 0
  %775 = vperm.xlu0 %774, %v673
  %v776 = vpop.permute.xlu0 %775
  %779 = vset.pattern.permute.xlu0 0
  %780 = vperm.xlu0 %779, %v674
  %v781 = vpop.permute.xlu0 %780
  %784 = vset.pattern.permute.xlu0 0
  %785 = vperm.xlu0 %784, %v675
  %v786 = vpop.permute.xlu0 %785
  %789 = vset.pattern.permute.xlu0 0
  %790 = vperm.xlu0 %789, %v676
  %v791 = vpop.permute.xlu0 %790
  %794 = vset.pattern.permute.xlu0 0
  %795 = vperm.xlu0 %794, %v677
  %v796 = vpop.permute.xlu0 %795
  %799 = vset.pattern.permute.xlu0 0
  %800 = vperm.xlu0 %799, %v678
  %v801 = vpop.permute.xlu0 %800
  %804 = vset.pattern.permute.xlu0 0
  %805 = vperm.xlu0 %804, %v679
  %v806 = vpop.permute.xlu0 %805
  %809 = vset.pattern.permute.xlu0 0
  %810 = vperm.xlu0 %809, %v680
  %v811 = vpop.permute.xlu0 %810
  %814 = vset.pattern.permute.xlu0 0
  %815 = vperm.xlu0 %814, %v681
  %v816 = vpop.permute.xlu0 %815
  %819 = vset.pattern.permute.xlu0 0
  %820 = vperm.xlu0 %819, %v682
  %v821 = vpop.permute.xlu0 %820
  %824 = vset.pattern.permute.xlu0 0
  %825 = vperm.xlu0 %824, %v683
  %v826 = vpop.permute.xlu0 %825
  %829 = vset.pattern.permute.xlu0 0
  %830 = vperm.xlu0 %829, %v684
  %v831 = vpop.permute.xlu0 %830
  %834 = vset.pattern.permute.xlu0 0
  %835 = vperm.xlu0 %834, %v685
  %v836 = vpop.permute.xlu0 %835
  %839 = vset.pattern.permute.xlu0 0
  %840 = vperm.xlu0 %839, %v686
  %v841 = vpop.permute.xlu0 %840
  %844 = vset.pattern.permute.xlu0 0
  %845 = vperm.xlu0 %844, %v687
  %v846 = vpop.permute.xlu0 %845
  %v880 = vunpack.c.l.b16 %v608
  %v881 = vunpack.c.h.b16 %v608
  %v882 = vunpack.c.l.b16 %v609
  %v883 = vunpack.c.h.b16 %v609
  %v884 = vunpack.c.l.b16 %v610
  %v885 = vunpack.c.h.b16 %v610
  %v886 = vunpack.c.l.b16 %v611
  %v887 = vunpack.c.h.b16 %v611
  %v888 = vunpack.c.l.b16 %v612
  %v889 = vunpack.c.h.b16 %v612
  %v890 = vunpack.c.l.b16 %v613
  %v891 = vunpack.c.h.b16 %v613
  %v892 = vunpack.c.l.b16 %v614
  %v893 = vunpack.c.h.b16 %v614
  %v894 = vunpack.c.l.b16 %v615
  %v895 = vunpack.c.h.b16 %v615
  %v896 = vunpack.c.l.b16 %v616
  %v897 = vunpack.c.h.b16 %v616
  %v898 = vunpack.c.l.b16 %v617
  %v899 = vunpack.c.h.b16 %v617
  %v900 = vunpack.c.l.b16 %v618
  %v901 = vunpack.c.h.b16 %v618
  %v902 = vunpack.c.l.b16 %v619
  %v903 = vunpack.c.h.b16 %v619
  %v904 = vunpack.c.l.b16 %v620
  %v905 = vunpack.c.h.b16 %v620
  %v906 = vunpack.c.l.b16 %v621
  %v907 = vunpack.c.h.b16 %v621
  %v908 = vunpack.c.l.b16 %v622
  %v909 = vunpack.c.h.b16 %v622
  %v910 = vunpack.c.l.b16 %v623
  %v911 = vunpack.c.h.b16 %v623
  %v912 = vunpack.c.l.b16 %v624
  %v913 = vunpack.c.h.b16 %v624
  %v914 = vunpack.c.l.b16 %v625
  %v915 = vunpack.c.h.b16 %v625
  %v916 = vunpack.c.l.b16 %v626
  %v917 = vunpack.c.h.b16 %v626
  %v918 = vunpack.c.l.b16 %v627
  %v919 = vunpack.c.h.b16 %v627
  %v920 = vunpack.c.l.b16 %v628
  %v921 = vunpack.c.h.b16 %v628
  %v922 = vunpack.c.l.b16 %v629
  %v923 = vunpack.c.h.b16 %v629
  %v924 = vunpack.c.l.b16 %v630
  %v925 = vunpack.c.h.b16 %v630
  %v926 = vunpack.c.l.b16 %v631
  %v927 = vunpack.c.h.b16 %v631
  %v928 = vunpack.c.l.b16 %v632
  %v929 = vunpack.c.h.b16 %v632
  %v930 = vunpack.c.l.b16 %v633
  %v931 = vunpack.c.h.b16 %v633
  %v932 = vunpack.c.l.b16 %v634
  %v933 = vunpack.c.h.b16 %v634
  %v934 = vunpack.c.l.b16 %v635
  %v935 = vunpack.c.h.b16 %v635
  %v936 = vunpack.c.l.b16 %v636
  %v937 = vunpack.c.h.b16 %v636
  %v938 = vunpack.c.l.b16 %v637
  %v939 = vunpack.c.h.b16 %v637
  %v940 = vunpack.c.l.b16 %v638
  %v941 = vunpack.c.h.b16 %v638
  %v942 = vunpack.c.l.b16 %v639
  %v943 = vunpack.c.h.b16 %v639
  %v944 = vpack.c.b16 %v882, %v880
  %v945 = vpack.c.b16 %v883, %v881
  %v946 = vpack.c.b16 %v886, %v884
  %v947 = vpack.c.b16 %v887, %v885
  %v948 = vpack.c.b16 %v890, %v888
  %v949 = vpack.c.b16 %v891, %v889
  %v950 = vpack.c.b16 %v894, %v892
  %v951 = vpack.c.b16 %v895, %v893
  %v952 = vpack.c.b16 %v898, %v896
  %v953 = vpack.c.b16 %v899, %v897
  %v954 = vpack.c.b16 %v902, %v900
  %v955 = vpack.c.b16 %v903, %v901
  %v956 = vpack.c.b16 %v906, %v904
  %v957 = vpack.c.b16 %v907, %v905
  %v958 = vpack.c.b16 %v910, %v908
  %v959 = vpack.c.b16 %v911, %v909
  %v960 = vpack.c.b16 %v914, %v912
  %v961 = vpack.c.b16 %v915, %v913
  %v962 = vpack.c.b16 %v918, %v916
  %v963 = vpack.c.b16 %v919, %v917
  %v964 = vpack.c.b16 %v922, %v920
  %v965 = vpack.c.b16 %v923, %v921
  %v966 = vpack.c.b16 %v926, %v924
  %v967 = vpack.c.b16 %v927, %v925
  %v968 = vpack.c.b16 %v930, %v928
  %v969 = vpack.c.b16 %v931, %v929
  %v970 = vpack.c.b16 %v934, %v932
  %v971 = vpack.c.b16 %v935, %v933
  %v972 = vpack.c.b16 %v938, %v936
  %v973 = vpack.c.b16 %v939, %v937
  %v974 = vpack.c.b16 %v942, %v940
  %v975 = vpack.c.b16 %v943, %v941
  %1008 = vmatprep.subr.bf16.mxu0 0
  %1009 = vmatpush1.bf16.msra.mxu0 %v640
  %1010 = vmatprep.subr.bf16.mxu0 0
  %1011 = vmatpush1.bf16.msra.mxu0 %v641
  %1012 = vmatprep.subr.bf16.mxu0 0
  %1013 = vmatpush1.bf16.msra.mxu0 %v642
  %1014 = vmatprep.subr.bf16.mxu0 0
  %1015 = vmatpush1.bf16.msra.mxu0 %v643
  %1016 = vmatprep.subr.bf16.mxu0 0
  %1017 = vmatpush1.bf16.msra.mxu0 %v644
  %1018 = vmatprep.subr.bf16.mxu0 0
  %1019 = vmatpush1.bf16.msra.mxu0 %v645
  %1020 = vmatprep.subr.bf16.mxu0 0
  %1021 = vmatpush1.bf16.msra.mxu0 %v646
  %1022 = vmatprep.subr.bf16.mxu0 0
  %1023 = vmatpush1.bf16.msra.mxu0 %v647
  %1024 = vmatprep.subr.bf16.mxu0 0
  %1025 = vmatpush1.bf16.msra.mxu0 %v648
  %1026 = vmatprep.subr.bf16.mxu0 0
  %1027 = vmatpush1.bf16.msra.mxu0 %v649
  %1028 = vmatprep.subr.bf16.mxu0 0
  %1029 = vmatpush1.bf16.msra.mxu0 %v650
  %1030 = vmatprep.subr.bf16.mxu0 0
  %1031 = vmatpush1.bf16.msra.mxu0 %v651
  %1032 = vmatprep.subr.bf16.mxu0 0
  %1033 = vmatpush1.bf16.msra.mxu0 %v652
  %1034 = vmatprep.subr.bf16.mxu0 0
  %1035 = vmatpush1.bf16.msra.mxu0 %v653
  %1036 = vmatprep.subr.bf16.mxu0 0
  %1037 = vmatpush1.bf16.msra.mxu0 %v654
  %1038 = vmatprep.subr.bf16.mxu0 0
  %1039 = vmatpush1.bf16.msra.mxu0 %v655
  %1040 = vmatprep.mubr.bf16.mxu0 %v945
  %1041 = vmatmul.mubr.bf16.gmra.mrb[0].mxu0 %v944
  %v1042 = vpop.f32.mrb[0].mxu0
  %v1043 = vadd.f32 %v691, %v1042
  %v1044 = vpop.f32.mrb[0].mxu0
  %v1045 = vpop.f32.mrb[0].mxu0
  %v1046 = vadd.f32 %v696, %v1045
  %v1047 = vpop.f32.mrb[0].mxu0
  %1048 = vmatprep.mubr.bf16.mxu0 %v947
  %1049 = vmatmul.mubr.bf16.gmra.mrb[0].mxu0 %v946
  %v1050 = vpop.f32.mrb[0].mxu0
  %v1051 = vadd.f32 %v701, %v1050
  %v1052 = vpop.f32.mrb[0].mxu0
  %v1053 = vpop.f32.mrb[0].mxu0
  %v1054 = vadd.f32 %v706, %v1053
  %v1055 = vpop.f32.mrb[0].mxu0
  %1056 = vmatprep.mubr.bf16.mxu0 %v949
  %1057 = vmatmul.mubr.bf16.gmra.mrb[0].mxu0 %v948
  %v1058 = vpop.f32.mrb[0].mxu0
  %v1059 = vadd.f32 %v711, %v1058
  %v1060 = vpop.f32.mrb[0].mxu0
  %v1061 = vpop.f32.mrb[0].mxu0
  %v1062 = vadd.f32 %v716, %v1061
  %v1063 = vpop.f32.mrb[0].mxu0
  %1064 = vmatprep.mubr.bf16.mxu0 %v951
  %1065 = vmatmul.mubr.bf16.gmra.mrb[0].mxu0 %v950
  %v1066 = vpop.f32.mrb[0].mxu0
  %v1067 = vadd.f32 %v721, %v1066
  %v1068 = vpop.f32.mrb[0].mxu0
  %v1069 = vpop.f32.mrb[0].mxu0
  %v1070 = vadd.f32 %v726, %v1069
  %v1071 = vpop.f32.mrb[0].mxu0
  %1072 = vmatprep.mubr.bf16.mxu0 %v953
  %1073 = vmatmul.mubr.bf16.gmra.mrb[0].mxu0 %v952
  %v1074 = vpop.f32.mrb[0].mxu0
  %v1075 = vadd.f32 %v731, %v1074
  %v1076 = vpop.f32.mrb[0].mxu0
  %v1077 = vpop.f32.mrb[0].mxu0
  %v1078 = vadd.f32 %v736, %v1077
  %v1079 = vpop.f32.mrb[0].mxu0
  %1080 = vmatprep.mubr.bf16.mxu0 %v955
  %1081 = vmatmul.mubr.bf16.gmra.mrb[0].mxu0 %v954
  %v1082 = vpop.f32.mrb[0].mxu0
  %v1083 = vadd.f32 %v741, %v1082
  %v1084 = vpop.f32.mrb[0].mxu0
  %v1085 = vpop.f32.mrb[0].mxu0
  %v1086 = vadd.f32 %v746, %v1085
  %v1087 = vpop.f32.mrb[0].mxu0
  %1088 = vmatprep.mubr.bf16.mxu0 %v957
  %1089 = vmatmul.mubr.bf16.gmra.mrb[0].mxu0 %v956
  %v1090 = vpop.f32.mrb[0].mxu0
  %v1091 = vadd.f32 %v751, %v1090
  %v1092 = vpop.f32.mrb[0].mxu0
  %v1093 = vpop.f32.mrb[0].mxu0
  %v1094 = vadd.f32 %v756, %v1093
  %v1095 = vpop.f32.mrb[0].mxu0
  %1096 = vmatprep.mubr.bf16.mxu0 %v959
  %1097 = vmatmul.mubr.bf16.gmra.mrb[0].mxu0 %v958
  %v1098 = vpop.f32.mrb[0].mxu0
  %v1099 = vadd.f32 %v761, %v1098
  %v1100 = vpop.f32.mrb[0].mxu0
  %v1101 = vpop.f32.mrb[0].mxu0
  %v1102 = vadd.f32 %v766, %v1101
  %v1103 = vpop.f32.mrb[0].mxu0
  %1104 = vmatprep.mubr.bf16.mxu0 %v961
  %1105 = vmatmul.mubr.bf16.gmra.mrb[0].mxu0 %v960
  %v1106 = vpop.f32.mrb[0].mxu0
  %v1107 = vadd.f32 %v771, %v1106
  %v1108 = vpop.f32.mrb[0].mxu0
  %v1109 = vpop.f32.mrb[0].mxu0
  %v1110 = vadd.f32 %v776, %v1109
  %v1111 = vpop.f32.mrb[0].mxu0
  %1112 = vmatprep.mubr.bf16.mxu0 %v963
  %1113 = vmatmul.mubr.bf16.gmra.mrb[0].mxu0 %v962
  %v1114 = vpop.f32.mrb[0].mxu0
  %v1115 = vadd.f32 %v781, %v1114
  %v1116 = vpop.f32.mrb[0].mxu0
  %v1117 = vpop.f32.mrb[0].mxu0
  %v1118 = vadd.f32 %v786, %v1117
  %v1119 = vpop.f32.mrb[0].mxu0
  %1120 = vmatprep.mubr.bf16.mxu0 %v965
  %1121 = vmatmul.mubr.bf16.gmra.mrb[0].mxu0 %v964
  %v1122 = vpop.f32.mrb[0].mxu0
  %v1123 = vadd.f32 %v791, %v1122
  %v1124 = vpop.f32.mrb[0].mxu0
  %v1125 = vpop.f32.mrb[0].mxu0
  %v1126 = vadd.f32 %v796, %v1125
  %v1127 = vpop.f32.mrb[0].mxu0
  %1128 = vmatprep.mubr.bf16.mxu0 %v967
  %1129 = vmatmul.mubr.bf16.gmra.mrb[0].mxu0 %v966
  %v1130 = vpop.f32.mrb[0].mxu0
  %v1131 = vadd.f32 %v801, %v1130
  %v1132 = vpop.f32.mrb[0].mxu0
  %v1133 = vpop.f32.mrb[0].mxu0
  %v1134 = vadd.f32 %v806, %v1133
  %v1135 = vpop.f32.mrb[0].mxu0
  %1136 = vmatprep.mubr.bf16.mxu0 %v969
  %1137 = vmatmul.mubr.bf16.gmra.mrb[0].mxu0 %v968
  %v1138 = vpop.f32.mrb[0].mxu0
  %v1139 = vadd.f32 %v811, %v1138
  %v1140 = vpop.f32.mrb[0].mxu0
  %v1141 = vpop.f32.mrb[0].mxu0
  %v1142 = vadd.f32 %v816, %v1141
  %v1143 = vpop.f32.mrb[0].mxu0
  %1144 = vmatprep.mubr.bf16.mxu0 %v971
  %1145 = vmatmul.mubr.bf16.gmra.mrb[0].mxu0 %v970
  %v1146 = vpop.f32.mrb[0].mxu0
  %v1147 = vadd.f32 %v821, %v1146
  %v1148 = vpop.f32.mrb[0].mxu0
  %v1149 = vpop.f32.mrb[0].mxu0
  %v1150 = vadd.f32 %v826, %v1149
  %v1151 = vpop.f32.mrb[0].mxu0
  %1152 = vmatprep.mubr.bf16.mxu0 %v973
  %1153 = vmatmul.mubr.bf16.gmra.mrb[0].mxu0 %v972
  %v1154 = vpop.f32.mrb[0].mxu0
  %v1155 = vadd.f32 %v831, %v1154
  %v1156 = vpop.f32.mrb[0].mxu0
  %v1157 = vpop.f32.mrb[0].mxu0
  %v1158 = vadd.f32 %v836, %v1157
  %v1159 = vpop.f32.mrb[0].mxu0
  %1160 = vmatprep.mubr.bf16.mxu0 %v975
  %1161 = vmatmul.mubr.bf16.gmra.mrb[0].mxu0 %v974
  %v1162 = vpop.f32.mrb[0].mxu0
  %v1163 = vadd.f32 %v841, %v1162
  %v1164 = vpop.f32.mrb[0].mxu0
  %v1165 = vpop.f32.mrb[0].mxu0
  %v1166 = vadd.f32 %v846, %v1165
  %v1167 = vpop.f32.mrb[0].mxu0
  %1168 = vdwg.mxu0
  %v1169 = vmax.f32 %v1043, 0.0
  %v1170 = vmax.f32 %v1046, 0.0
  %v1171 = vmax.f32 %v1051, 0.0
  %v1172 = vmax.f32 %v1054, 0.0
  %v1173 = vmax.f32 %v1059, 0.0
  %v1174 = vmax.f32 %v1062, 0.0
  %v1175 = vmax.f32 %v1067, 0.0
  %v1176 = vmax.f32 %v1070, 0.0
  %v1177 = vmax.f32 %v1075, 0.0
  %v1178 = vmax.f32 %v1078, 0.0
  %v1179 = vmax.f32 %v1083, 0.0
  %v1180 = vmax.f32 %v1086, 0.0
  %v1181 = vmax.f32 %v1091, 0.0
  %v1182 = vmax.f32 %v1094, 0.0
  %v1183 = vmax.f32 %v1099, 0.0
  %v1184 = vmax.f32 %v1102, 0.0
  %v1185 = vmax.f32 %v1107, 0.0
  %v1186 = vmax.f32 %v1110, 0.0
  %v1187 = vmax.f32 %v1115, 0.0
  %v1188 = vmax.f32 %v1118, 0.0
  %v1189 = vmax.f32 %v1123, 0.0
  %v1190 = vmax.f32 %v1126, 0.0
  %v1191 = vmax.f32 %v1131, 0.0
  %v1192 = vmax.f32 %v1134, 0.0
  %v1193 = vmax.f32 %v1139, 0.0
  %v1194 = vmax.f32 %v1142, 0.0
  %v1195 = vmax.f32 %v1147, 0.0
  %v1196 = vmax.f32 %v1150, 0.0
  %v1197 = vmax.f32 %v1155, 0.0
  %v1198 = vmax.f32 %v1158, 0.0
  %v1199 = vmax.f32 %v1163, 0.0
  %v1200 = vmax.f32 %v1166, 0.0
  %v1201 = vld [vmem:[%s5] sm:$0xff]
  %v1202 = vld [vmem:[%s5 + $0x8] sm:$0xff]
  %v1203 = vld [vmem:[#allocation2] sm:$0x1]
  %v1205 = vlaneseq
  %v1206 = vshrl.u32 %v1205, 7
  %v1207 = vsub.s32 0, %v1206
  %v1208 = vrot.slane %v1203, %v1207
  %1209 = vset.pattern.permute.xlu0 0
  %1210 = vperm.xlu0 %1209, %v1208
  %v1211 = vpop.permute.xlu0 %1210
  %1213 = vmatprep.subr.mxu0 0.0
  %1214 = vmatpush1.msra.mxu0 %v1169
  %1215 = vmatprep.subr.mxu0 0.0
  %1216 = vmatpush1.msra.mxu0 %v1170
  %1217 = vmatprep.subr.mxu0 0.0
  %1218 = vmatpush1.msra.mxu0 %v1171
  %1219 = vmatprep.subr.mxu0 0.0
  %1220 = vmatpush1.msra.mxu0 %v1172
  %1221 = vmatprep.subr.mxu0 0.0
  %1222 = vmatpush1.msra.mxu0 %v1173
  %1223 = vmatprep.subr.mxu0 0.0
  %1224 = vmatpush1.msra.mxu0 %v1174
  %1225 = vmatprep.subr.mxu0 0.0
  %1226 = vmatpush1.msra.mxu0 %v1175
  %1227 = vmatprep.subr.mxu0 0.0
  %1228 = vmatpush1.msra.mxu0 %v1176
  %1229 = vmatprep.subr.mxu0 0.0
  %1230 = vmatpush1.msra.mxu0 %v1177
  %1231 = vmatprep.subr.mxu0 0.0
  %1232 = vmatpush1.msra.mxu0 %v1178
  %1233 = vmatprep.subr.mxu0 0.0
  %1234 = vmatpush1.msra.mxu0 %v1179
  %1235 = vmatprep.subr.mxu0 0.0
  %1236 = vmatpush1.msra.mxu0 %v1180
  %1237 = vmatprep.subr.mxu0 0.0
  %1238 = vmatpush1.msra.mxu0 %v1181
  %1239 = vmatprep.subr.mxu0 0.0
  %1240 = vmatpush1.msra.mxu0 %v1182
  %1241 = vmatprep.subr.mxu0 0.0
  %1242 = vmatpush1.msra.mxu0 %v1183
  %1243 = vmatprep.subr.mxu0 0.0
  %1244 = vmatpush1.msra.mxu0 %v1184
  %1245 = vmatprep.subr.mxu0 0.0
  %1246 = vmatpush1.msra.mxu0 %v1185
  %1247 = vmatprep.subr.mxu0 0.0
  %1248 = vmatpush1.msra.mxu0 %v1186
  %1249 = vmatprep.subr.mxu0 0.0
  %1250 = vmatpush1.msra.mxu0 %v1187
  %1251 = vmatprep.subr.mxu0 0.0
  %1252 = vmatpush1.msra.mxu0 %v1188
  %1253 = vmatprep.subr.mxu0 0.0
  %1254 = vmatpush1.msra.mxu0 %v1189
  %1255 = vmatprep.subr.mxu0 0.0
  %1256 = vmatpush1.msra.mxu0 %v1190
  %1257 = vmatprep.subr.mxu0 0.0
  %1258 = vmatpush1.msra.mxu0 %v1191
  %1259 = vmatprep.subr.mxu0 0.0
  %1260 = vmatpush1.msra.mxu0 %v1192
  %1261 = vmatprep.subr.mxu0 0.0
  %1262 = vmatpush1.msra.mxu0 %v1193
  %1263 = vmatprep.subr.mxu0 0.0
  %1264 = vmatpush1.msra.mxu0 %v1194
  %1265 = vmatprep.subr.mxu0 0.0
  %1266 = vmatpush1.msra.mxu0 %v1195
  %1267 = vmatprep.subr.mxu0 0.0
  %1268 = vmatpush1.msra.mxu0 %v1196
  %1269 = vmatprep.subr.mxu0 0.0
  %1270 = vmatpush1.msra.mxu0 %v1197
  %1271 = vmatprep.subr.mxu0 0.0
  %1272 = vmatpush1.msra.mxu0 %v1198
  %1273 = vmatprep.subr.mxu0 0.0
  %1274 = vmatpush1.msra.mxu0 %v1199
  %1275 = vmatprep.subr.mxu0 0.0
  %1276 = vmatpush1.msra.mxu0 %v1200
  %1277 = vmatprep.mubr.f32.mxu0 %v1202
  %1278 = vmatmul.mubr.f32.gmra.mrb[0].mxu0 %v1201
  %v1279 = vpop.f32.mrb[0].mxu0
  %v1280 = vadd.f32 %v1211, %v1279
  %v1281 = vpop.f32.mrb[0].mxu0
  %1282 = vdwg.mxu0
  %1283 = vst [vmem:[%s7] sm:$0xff] %v1280
  // Predicated region
  $region30: #{soft_q_forward.1} parent=0 // pred_check
    _
  $region31: #{soft_q_forward.1} parent=0 // pred_check_branch
    %1285 = sbr.rel (0) target = $region33
  $region32: #{soft_q_forward.1} parent=0 // pred_region
    _
  $region33: #{soft_q_forward.1} parent=0 // pred_fallthru
    _
  // Predicated region
  $region34: #{soft_q_forward.1} parent=0 // pred_check
    _
  $region35: #{soft_q_forward.1} parent=0 // pred_check_branch
    %1287 = sbr.rel (0) target = $region37
  $region36: #{soft_q_forward.1} parent=0 // pred_region
    _
  $region37: #{soft_q_forward.1} parent=0 // pred_fallthru
    _

</llo_original>
